<compile_context>
chip_gen: v6e
topology: v6e:2x2x1
jax: 0.10.0
libtpu: 0.0.40
codegen_flags: <defaults>
</compile_context>

<pallas_src>
import numpy as np
import jax
import jax.numpy as jnp
from jax import lax
from jax.experimental import pallas as pl
from jax.experimental.pallas import tpu as pltpu

_LANE = 128
_SUBLANE = 8


def _pair(v):
    return (v, v) if isinstance(v, int) else (int(v[0]), int(v[1]))


def _round_up(n, m):
    return -(-n // m) * m


def _out_size(i, k, s, p, ceil_mode):
    if ceil_mode:
        o = -(-(i + 2 * p - k) // s) + 1
        # PyTorch rule: last window must start inside the input or left padding
        if (o - 1) * s >= i + p:
            o -= 1
    else:
        o = (i + 2 * p - k) // s + 1
    return int(o)


def _pool_matrix(in_size, out_size, k, s, p, count_include_pad, transpose):
    """Build the 1-D pooling/averaging matrix for one spatial axis."""
    m = np.zeros((out_size, in_size), dtype=np.float32)
    for o in range(out_size):
        start = o * s - p
        end = start + k
        vs = max(start, 0)
        ve = min(end, in_size)
        if count_include_pad:
            w = 1.0 / float(k)
        else:
            w = 1.0 / float(max(ve - vs, 1))
        if ve > vs:
            m[o, vs:ve] = w
    return m.T if transpose else m


def _pick_plane_batch(nc, h, w, oh, ow, itemsize):
    """Largest number of (H, W) planes per grid step that fits a VMEM budget."""
    ohw = oh * ow
    in_blk = _round_up(h, _SUBLANE) * _round_up(w, _LANE) * itemsize
    out_blk = _round_up(ohw, _LANE) * itemsize
    # f32 intermediates per plane: column-pooled t, broadcast Ph, row-pooled y,
    # and the lane-dense flattened y.
    tmp = (_round_up(h, _SUBLANE) * _round_up(ow, _LANE)
           + _round_up(oh, _SUBLANE) * _round_up(h, _LANE)
           + _round_up(oh, _SUBLANE) * _round_up(ow, _LANE)
           + _round_up(ohw, _LANE)) * 4
    per_plane = 2 * in_blk + 2 * out_blk + tmp   # in/out blocks are double-buffered
    budget = 24 * 1024 * 1024                    # conservative: fits v5e/v6e/v7x VMEM
    b = max(1, budget // per_plane)
    if nc > 1:
        # Keep >= 2 grid steps so the DMA pipeline (and both v7x TensorCores)
        # have work to overlap / balance.
        b = min(b, _round_up(nc, 2) // 2)
    return int(min(b, nc, 512))


def _avgpool_kernel(x_ref, ph_ref, pw_ref, o_ref):
    # x_ref:  (B, H, W)       batch of input planes
    # ph_ref: (oH, H)         row-pooling matrix
    # pw_ref: (W, oW)         column-pooling matrix
    # o_ref:  (1, B, oH*oW)   lane-dense flattened output planes
    x = x_ref[...].astype(jnp.float32)                       # (B, H, W)
    b, h, w = x.shape
    oh = ph_ref.shape[0]
    ow = pw_ref.shape[1]

    # Column pool: one tall MXU matmul over every row of every plane.
    t = jnp.dot(x.reshape(b * h, w), pw_ref[...],
                preferred_element_type=jnp.float32)          # (B*H, oW)

    # Row pool: batched matmul with Ph broadcast across the plane batch.
    ph_b = jnp.broadcast_to(ph_ref[...], (b, oh, h))
    y = lax.dot_general(
        ph_b, t.reshape(b, h, ow),
        dimension_numbers=(((2,), (1,)), ((0,), (0,))),
        preferred_element_type=jnp.float32)                  # (B, oH, oW)

    # Lane-dense store: flatten each plane's (oH, oW) into the last dim.
    o_ref[0] = y.reshape(b, oh * ow).astype(o_ref.dtype)


def avg_pool2d(x, kernel_size, stride=None, padding=0,
               ceil_mode=False, count_include_pad=True):
    kh, kw = _pair(kernel_size)
    sh, sw = _pair(stride if stride is not None else kernel_size)
    padh, padw = _pair(padding)

    N, C, H, W = x.shape
    oH = _out_size(H, kh, sh, padh, ceil_mode)
    oW = _out_size(W, kw, sw, padw, ceil_mode)

    Ph = jnp.asarray(_pool_matrix(H, oH, kh, sh, padh, count_include_pad, False))  # (oH, H)
    Pw = jnp.asarray(_pool_matrix(W, oW, kw, sw, padw, count_include_pad, True))   # (W, oW)

    NC = N * C
    itemsize = jnp.dtype(x.dtype).itemsize
    B = _pick_plane_batch(NC, H, W, oH, oW, itemsize)
    G = -(-NC // B)                 # number of grid steps
    NCp = G * B

    xf = x.reshape(NC, H, W)
    if NCp != NC:                   # pad plane count so the grid tiles evenly
        xf = jnp.concatenate(
            [xf, jnp.zeros((NCp - NC, H, W), dtype=xf.dtype)], axis=0)

    out = pl.pallas_call(
        _avgpool_kernel,
        out_shape=jax.ShapeDtypeStruct((G, B, oH * oW), x.dtype),
        grid_spec=pltpu.PrefetchScalarGridSpec(
            num_scalar_prefetch=0,
            grid=(G,),
            in_specs=[
                pl.BlockSpec((B, H, W), lambda i: (i, 0, 0)),
                pl.BlockSpec((oH, H), lambda i: (0, 0)),
                pl.BlockSpec((W, oW), lambda i: (0, 0)),
            ],
            out_specs=pl.BlockSpec((1, B, oH * oW), lambda i: (i, 0, 0)),
        ),
        compiler_params=pltpu.CompilerParams(
            dimension_semantics=("parallel",),
            vmem_limit_bytes=48 * 1024 * 1024,
        ),
    )(xf, Ph, Pw)

    out = out.reshape(NCp, oH, oW)[:NC]
    return out.reshape(N, C, oH, oW)


def _reference_avg_pool2d(x, kernel_size, stride, padding,
                          ceil_mode=False, count_include_pad=True):
    """Plain numpy reference for correctness checking (small shapes only)."""
    kh, kw = _pair(kernel_size)
    sh, sw = _pair(stride if stride is not None else kernel_size)
    padh, padw = _pair(padding)
    xn = np.asarray(x)
    N, C, H, W = xn.shape
    oH = _out_size(H, kh, sh, padh, ceil_mode)
    oW = _out_size(W, kw, sw, padw, ceil_mode)
    out = np.zeros((N, C, oH, oW), dtype=np.float32)
    for oh in range(oH):
        hs, he = oh * sh - padh, oh * sh - padh + kh
        vhs, vhe = max(hs, 0), min(he, H)
        for ow in range(oW):
            ws, we = ow * sw - padw, ow * sw - padw + kw
            vws, vwe = max(ws, 0), min(we, W)
            s = xn[:, :, vhs:vhe, vws:vwe].sum(axis=(2, 3))
            if count_include_pad:
                div = kh * kw
            else:
                div = max(vhe - vhs, 1) * max(vwe - vws, 1)
            out[:, :, oh, ow] = s / div
    return out


if __name__ == "__main__":
    k1, k2 = jax.random.split(jax.random.PRNGKey(0))

    # Test 1: pool of square window size=3, stride=2, padding=1
    # (like nn.AvgPool2d(3, 2, 1)).
    x = jax.random.normal(k1, (2, 4, 16, 16), dtype=jnp.float32)
    y = avg_pool2d(x, kernel_size=3, stride=2, padding=1,
                   ceil_mode=False, count_include_pad=True)
    y = jax.block_until_ready(y)
    y_ref = _reference_avg_pool2d(x, 3, 2, 1, False, True)
    assert y.shape == y_ref.shape, (y.shape, y_ref.shape)
    np.testing.assert_allclose(np.asarray(y), y_ref, rtol=1e-5, atol=1e-5)

    # Test 2: count_include_pad=False and a plane count that does not divide
    # evenly into the plane batch (exercises the padded-grid path).
    x2 = jax.random.normal(k2, (1, 3, 16, 16), dtype=jnp.float32)
    y2 = avg_pool2d(x2, kernel_size=3, stride=2, padding=1,
                    ceil_mode=False, count_include_pad=False)
    y2 = jax.block_until_ready(y2)
    y2_ref = _reference_avg_pool2d(x2, 3, 2, 1, False, False)
    assert y2.shape == y2_ref.shape, (y2.shape, y2_ref.shape)
    np.testing.assert_allclose(np.asarray(y2), y2_ref, rtol=1e-5, atol=1e-5)

    print("KERNEL_OK")
</pallas_src>

<mosaic_0001>
module attributes {stable_mosaic.version = 11 : i64} {
  func.func @_avgpool_kernel(%arg0: i32, %arg1: memref<4x16x16xf32, #tpu.memory_space<vmem>>, %arg2: memref<8x16xf32, #tpu.memory_space<vmem>>, %arg3: memref<16x8xf32, #tpu.memory_space<vmem>>, %arg4: memref<1x4x64xf32, #tpu.memory_space<vmem>>) attributes {dimension_semantics = [#tpu.dimension_semantics<parallel>], iteration_bounds = array<i64: 2>, scalar_prefetch = 0 : i64, scratch_operands = 0 : i64, tpu.core_type = #tpu.core_type<tc>, window_params = [{transform_indices = @transform_0, window_bounds = array<i64: 4, 16, 16>}, {pipeline_mode = #tpu.pipeline_mode<synchronous>, transform_indices = @transform_1, window_bounds = array<i64: 8, 16>}, {pipeline_mode = #tpu.pipeline_mode<synchronous>, transform_indices = @transform_2, window_bounds = array<i64: 16, 8>}, {transform_indices = @transform_3, window_bounds = array<i64: 1, 4, 64>}]} {
    %c0 = arith.constant 0 : index
    %c0_0 = arith.constant 0 : index
    %c0_1 = arith.constant 0 : index
    %0 = vector.load %arg1[%c0, %c0_0, %c0_1] : memref<4x16x16xf32, #tpu.memory_space<vmem>>, vector<4x16x16xf32>
    %1 = vector.shape_cast %0 : vector<4x16x16xf32> to vector<64x16xf32>
    %c0_2 = arith.constant 0 : index
    %c0_3 = arith.constant 0 : index
    %2 = vector.load %arg3[%c0_2, %c0_3] : memref<16x8xf32, #tpu.memory_space<vmem>>, vector<16x8xf32>
    %cst = arith.constant dense<0.000000e+00> : vector<64x8xf32>
    %3 = tpu.matmul %1, %2, %cst {dimension_numbers = #tpu.dot_dimension_numbers<[1], [0], [0], [1], [0, 0, 1, 1], [], []>} : vector<64x16xf32>, vector<16x8xf32>, vector<64x8xf32> -> vector<64x8xf32>
    %c0_4 = arith.constant 0 : index
    %c0_5 = arith.constant 0 : index
    %4 = vector.load %arg2[%c0_4, %c0_5] : memref<8x16xf32, #tpu.memory_space<vmem>>, vector<8x16xf32>
    %5 = vector.shape_cast %4 : vector<8x16xf32> to vector<1x8x16xf32>
    %6 = vector.broadcast %5 : vector<1x8x16xf32> to vector<4x8x16xf32>
    %7 = vector.shape_cast %3 : vector<64x8xf32> to vector<4x16x8xf32>
    %cst_6 = arith.constant dense<0.000000e+00> : vector<4x8x8xf32>
    %8 = tpu.matmul %6, %7, %cst_6 {dimension_numbers = #tpu.dot_dimension_numbers<[2], [1], [1], [2], [0, 0, 0, 1, 1, 2], [0], [0]>} : vector<4x8x16xf32>, vector<4x16x8xf32>, vector<4x8x8xf32> -> vector<4x8x8xf32>
    %9 = vector.shape_cast %8 : vector<4x8x8xf32> to vector<4x64xf32>
    %c0_7 = arith.constant 0 : index
    %c0_8 = arith.constant 0 : index
    %c0_9 = arith.constant 0 : index
    %10 = vector.load %arg4[%c0_7, %c0_8, %c0_9] : memref<1x4x64xf32, #tpu.memory_space<vmem>>, vector<1x4x64xf32>
    %11 = vector.shape_cast %10 : vector<1x4x64xf32> to vector<4x64xf32>
    %12 = vector.shape_cast %9 : vector<4x64xf32> to vector<1x4x64xf32>
    tpu.vector_store %arg4[%c0_7, %c0_8, %c0_9], %12 {strides = array<i32>} : memref<1x4x64xf32, #tpu.memory_space<vmem>>, vector<1x4x64xf32>,
    return
  }
  func.func @transform_0(%arg0: i32) -> (i32, i32, i32) {
    %c0_i32 = arith.constant 0 : i32
    %c0_i32_0 = arith.constant 0 : i32
    %c0_i32_1 = arith.constant 0 : i32
    return %arg0, %c0_i32, %c0_i32_0 : i32, i32, i32
  }
  func.func @transform_1(%arg0: i32) -> (i32, i32) {
    %c0_i32 = arith.constant 0 : i32
    %c0_i32_0 = arith.constant 0 : i32
    %c0_i32_1 = arith.constant 0 : i32
    return %c0_i32, %c0_i32_0 : i32, i32
  }
  func.func @transform_2(%arg0: i32) -> (i32, i32) {
    %c0_i32 = arith.constant 0 : i32
    %c0_i32_0 = arith.constant 0 : i32
    %c0_i32_1 = arith.constant 0 : i32
    return %c0_i32, %c0_i32_0 : i32, i32
  }
  func.func @transform_3(%arg0: i32) -> (i32, i32, i32) {
    %c0_i32 = arith.constant 0 : i32
    %c0_i32_0 = arith.constant 0 : i32
    %c0_i32_1 = arith.constant 0 : i32
    return %arg0, %c0_i32, %c0_i32_0 : i32, i32, i32
  }
}

</mosaic_0001>

<llo_original>
// kernel: tpu_custom_call.1
$region0: #{tpu_custom_call.1}
  #allocation0 [shape = 'u32[]', space=smem, size = 0x4, offset = 0x4, fixed_abs, tag = 'smem constant byte address 0x4 - core index']
  #allocation1 [shape = 'u32[144,128]{1,0:T(1,128)}', space=vmem, size = 0x12000, scoped, tag = 'internal scratch']
  %s0 = inlined_call_operand.hbm [shape: f32[8,16,16], index: 0, kind: input, shape index: {}]
  %s1 = inlined_call_operand.vmem [shape: f32[8,16], index: 1, kind: input, shape index: {}]
  %s2 = inlined_call_operand.vmem [shape: f32[16,8], index: 2, kind: input, shape index: {}]
  %s3 = inlined_call_operand.hbm [shape: f32[2,4,64], index: 3, kind: output, shape index: {}]
  %s4 = sld [smem:[#allocation0]]
  $region49: #{tpu_custom_call.1} parent=0
    _
  %s6 = ssub.s32 1, %s4
  %s7 = scalar_select 0, %s6, %s4
  $region1: #{tpu_custom_call.1} parent=0
    #allocation2 [shape = 'u8[65536]{0}', space=vmem, size = 0x10000, scoped, tag = 'input window, operand 0']
    #allocation3 [shape = 's32[2]{0}', space=sflag, size = 0x8, scoped, tag = 'scoped memory for tpu_custom_call.1']
    #allocation4 [shape = 's32[2]{0}', space=sflag, size = 0x8, scoped, tag = 'scoped memory for tpu_custom_call.1']
    #allocation5 [shape = 'u8[4096]{0}', space=vmem, size = 0x1000, scoped, tag = 'output window, operand 0']
    %8 = vsyncpa [#allocation3], 0
    %s9 = scalar_lea.sflag [#allocation3], 1
    %10 = vsyncpa %s9, 0
    %11 = vsyncpa [#allocation4], 0
    %s12 = scalar_lea.sflag [#allocation4], 1
    %13 = vsyncpa %s12, 0
    loop: start=0, step=1, limit=4
    $region2: #{tpu_custom_call.1} parent=1 // loop_pre_header
      _
    $region3: #{tpu_custom_call.1} parent=1 // loop_header
      %s15 = sphi 0, %s19
      %p16 = scmp.ge.s32.totalorder %s15, 4
      %s25 = sphi 0, %s27
      %s28 = sphi 0, %s25
      %s29 = sphi 0, %s28
      %s45 = sphi 0, %s29
      %s49 = sphi 0, %s49
      %s51 = sphi 0, %s49
      %s52 = sphi 0, %s51
      %s66 = sphi 0, %s52
      %s70 = sphi 0, %s70
      %s72 = sphi 0, %s70
      %s73 = sphi 0, %s72
      %s87 = sphi 0, %s73
      %s93 = sphi 0, %s95
      %s96 = sphi 0, %s93
      %s97 = sphi 0, %s96
      %s113 = sphi 0, %s97
    $region4: #{tpu_custom_call.1} parent=1 // loop_header_branch
      %18 = sbr.rel (%p16) target = $region8
    $region5: #{tpu_custom_call.1} parent=1 // loop_body
      %s20 = ssub.s32 %s15, 1
      %s21 = ssub.s32 %s15, 2
      %s22 = sadd.s32 %s15, 1
      %s23 = ssub.s32 %s15, %s22
      %p24 = scmp.eq.s32.totalorder %s23, 0
      %s26 = sadd.s32 %s25, 1
      %s27 = scalar_select %p24, %s25, %s26
      %p30 = pneg %p24
      %p31 = scmp.eq.s32.totalorder %s15, 1
      %p32 = por %p30, %p31
      %p33 = scmp.ne.s32.totalorder %s25, %s28
      %p34 = scmp.eq.s32.totalorder %s15, 0
      %p35 = por %p33, %p34
      %p36 = scmp.ne.s32.totalorder %s25, %s28
      %p37 = scmp.eq.s32.totalorder %s20, 1
      %p38 = por %p36, %p37
      %p39 = scmp.ne.s32.totalorder %s28, %s29
      %p40 = scmp.eq.s32.totalorder %s20, 0
      %p41 = por %p39, %p40
      %p42 = scmp.ne.s32.totalorder %s28, %s29
      %p43 = scmp.eq.s32.totalorder %s21, 1
      %p44 = por %p42, %p43
      %p46 = scmp.ne.s32.totalorder %s29, %s45
      %p47 = scmp.eq.s32.totalorder %s21, 0
      %p48 = por %p46, %p47
      %s50 = sadd.s32 %s49, 1
      %p53 = scmp.eq.s32.totalorder %s15, 1
      %p54 = scmp.ne.s32.totalorder %s49, %s51
      %p55 = scmp.eq.s32.totalorder %s15, 0
      %p56 = por %p54, %p55
      %p57 = scmp.ne.s32.totalorder %s49, %s51
      %p58 = scmp.eq.s32.totalorder %s20, 1
      %p59 = por %p57, %p58
      %p60 = scmp.ne.s32.totalorder %s51, %s52
      %p61 = scmp.eq.s32.totalorder %s20, 0
      %p62 = por %p60, %p61
      %p63 = scmp.ne.s32.totalorder %s51, %s52
      %p64 = scmp.eq.s32.totalorder %s21, 1
      %p65 = por %p63, %p64
      %p67 = scmp.ne.s32.totalorder %s52, %s66
      %p68 = scmp.eq.s32.totalorder %s21, 0
      %p69 = por %p67, %p68
      %s71 = sadd.s32 %s70, 1
      %p74 = scmp.eq.s32.totalorder %s15, 1
      %p75 = scmp.ne.s32.totalorder %s70, %s72
      %p76 = scmp.eq.s32.totalorder %s15, 0
      %p77 = por %p75, %p76
      %p78 = scmp.ne.s32.totalorder %s70, %s72
      %p79 = scmp.eq.s32.totalorder %s20, 1
      %p80 = por %p78, %p79
      %p81 = scmp.ne.s32.totalorder %s72, %s73
      %p82 = scmp.eq.s32.totalorder %s20, 0
      %p83 = por %p81, %p82
      %p84 = scmp.ne.s32.totalorder %s72, %s73
      %p85 = scmp.eq.s32.totalorder %s21, 1
      %p86 = por %p84, %p85
      %p88 = scmp.ne.s32.totalorder %s73, %s87
      %p89 = scmp.eq.s32.totalorder %s21, 0
      %p90 = por %p88, %p89
      %s91 = ssub.s32 %s15, %s22
      %p92 = scmp.eq.s32.totalorder %s91, 0
      %s94 = sadd.s32 %s93, 1
      %s95 = scalar_select %p92, %s93, %s94
      %p98 = pneg %p92
      %p99 = scmp.eq.s32.totalorder %s15, 1
      %p100 = por %p98, %p99
      %p101 = scmp.ne.s32.totalorder %s93, %s96
      %p102 = scmp.eq.s32.totalorder %s15, 0
      %p103 = por %p101, %p102
      %p104 = scmp.ne.s32.totalorder %s93, %s96
      %p105 = scmp.eq.s32.totalorder %s20, 1
      %p106 = por %p104, %p105
      %p107 = scmp.ne.s32.totalorder %s96, %s97
      %p108 = scmp.eq.s32.totalorder %s20, 0
      %p109 = por %p107, %p108
      %p110 = scmp.ne.s32.totalorder %s96, %s97
      %p111 = scmp.eq.s32.totalorder %s21, 1
      %p112 = por %p110, %p111
      %p114 = scmp.ne.s32.totalorder %s97, %s113
      %p115 = scmp.eq.s32.totalorder %s21, 0
      %p116 = por %p114, %p115
      %p117 = scmp.le.s32.totalorder 1, %s15
      %p118 = scmp.lt.s32.totalorder %s15, 3
      %p119 = pnand %p117, %p118
      %p120 = pneg %p119
      // Predicated region
      $region9: #{tpu_custom_call.1} parent=5 // pred_check
        _
      $region10: #{tpu_custom_call.1} parent=5 // pred_check_branch
        %122 = sbr.rel (%p119) target = $region12
      $region11: #{tpu_custom_call.1} parent=5 // pred_region
        %s123 = ssub.s32 %s15, 1
        // Predicated region
        $region13: #{tpu_custom_call.1} parent=11 // pred_check
          %p124 = pneg %p62
        $region14: #{tpu_custom_call.1} parent=11 // pred_check_branch
          %126 = sbr.rel (%p124) target = $region16
        $region15: #{tpu_custom_call.1} parent=11 // pred_region
          _
        $region16: #{tpu_custom_call.1} parent=11 // pred_fallthru
          _
        // Predicated region
        $region17: #{tpu_custom_call.1} parent=11 // pred_check
          %p127 = pneg %p83
        $region18: #{tpu_custom_call.1} parent=11 // pred_check_branch
          %129 = sbr.rel (%p127) target = $region20
        $region19: #{tpu_custom_call.1} parent=11 // pred_region
          _
        $region20: #{tpu_custom_call.1} parent=11 // pred_fallthru
          _
      $region12: #{tpu_custom_call.1} parent=5 // pred_fallthru
        _
      %p130 = scmp.lt.s32.totalorder %s15, 2
      // Predicated region
      $region21: #{tpu_custom_call.1} parent=5 // pred_check
        %p131 = pneg %p130
      $region22: #{tpu_custom_call.1} parent=5 // pred_check_branch
        %133 = sbr.rel (%p131) target = $region24
      $region23: #{tpu_custom_call.1} parent=5 // pred_region
        // Predicated region
        $region25: #{tpu_custom_call.1} parent=23 // pred_check
          %p134 = pneg %p35
        $region26: #{tpu_custom_call.1} parent=23 // pred_check_branch
          %136 = sbr.rel (%p134) target = $region28
        $region27: #{tpu_custom_call.1} parent=23 // pred_region
          %s137 = sand.u32 %s25, 1
          %s138 = scalar_lea.sflag [#allocation3], %s137
          %s139 = sand.u32 %s25, 1
          %s140 = smul.addr %s139, 64
          %s141 = scalar_lea.vmem [#allocation2], %s140
          %s142 = smul.u32 4, %s15
          %s144 = ssub.s32 1024, 1024
          %145 = vsyncadd %s138, %s144
          %s146 = smul.addr %s142, 2
          %s147 = smul.addr %s146, 128
          %s148 = scalar_lea.hbm %s0, %s147
          %s149 = sshll.u32 %s141, 4
          %s150 = int_to_ptr.vmem [resolvable:$true] %s149
          %155 = dma.hbm_to_vmem [thread:$0]  %s148, 1024, %s150, %s138, 128, 128, 8
        $region28: #{tpu_custom_call.1} parent=23 // pred_fallthru
          _
      $region24: #{tpu_custom_call.1} parent=5 // pred_fallthru
        _
      %p156 = scmp.le.s32.totalorder 1, %s15
      %p157 = scmp.lt.s32.totalorder %s15, 3
      %p158 = pnand %p156, %p157
      %p159 = pneg %p158
      // Predicated region
      $region29: #{tpu_custom_call.1} parent=5 // pred_check
        _
      $region30: #{tpu_custom_call.1} parent=5 // pred_check_branch
        %161 = sbr.rel (%p158) target = $region32
      $region31: #{tpu_custom_call.1} parent=5 // pred_region
        %s162 = ssub.s32 %s15, 1
        %s163 = sand.u32 %s28, 1
        %s164 = scalar_lea.sflag [#allocation3], %s163
        %s165 = sand.u32 %s28, 1
        %s166 = smul.addr %s165, 64
        %s167 = scalar_lea.vmem [#allocation2], %s166
        // Predicated region
        $region33: #{tpu_custom_call.1} parent=31 // pred_check
          %p168 = pneg %p41
        $region34: #{tpu_custom_call.1} parent=31 // pred_check_branch
          %170 = sbr.rel (%p168) target = $region36
        $region35: #{tpu_custom_call.1} parent=31 // pred_region
          %171 = dma.done %s164, 1024
        $region36: #{tpu_custom_call.1} parent=31 // pred_fallthru
          _
        %s172 = sand.u32 %s28, 1
        %s173 = scalar_lea.sflag [#allocation3], %s172
        %s174 = sand.u32 %s28, 1
        %s175 = smul.addr %s174, 64
        %s176 = scalar_lea.vmem [#allocation2], %s175
        %p177 = pneg %p41
        %p178 = pneg %p38
        %p179 = pneg %p62
        %p180 = pneg %p59
        %p181 = pneg %p83
        %p182 = pneg %p80
        %p183 = pneg %p109
        %p184 = pneg %p106
        %s185 = sand.u32 %s96, 1
        %s186 = scalar_lea.sflag [#allocation4], %s185
        %s187 = sand.u32 %s96, 1
        %s188 = smul.addr %s187, 4
        %s189 = scalar_lea.vmem [#allocation5], %s188
        %s190 = smul.u32 4, %s20
        %v191 = vld [vmem:[%s167] sm:$0xff]
        %v192 = vld [vmem:[%s167 + $0x8] sm:$0xff]
        %v193 = vld [vmem:[%s167 + $0x10] sm:$0xff]
        %v194 = vld [vmem:[%s167 + $0x18] sm:$0xff]
        %v195 = vld [vmem:[%s167 + $0x20] sm:$0xff]
        %v196 = vld [vmem:[%s167 + $0x28] sm:$0xff]
        %v197 = vld [vmem:[%s167 + $0x30] sm:$0xff]
        %v198 = vld [vmem:[%s167 + $0x38] sm:$0xff]
        %v199 = vld [vmem:[%s2] sm:$0xff]
        %v200 = vld [vmem:[%s2 + $0x8] sm:$0xff]
        %vm201 = vcmask 130048
        %v203 = vsel %vm201, %v191, 0
        %v206 = vsel %vm201, %v192, 0
        %v209 = vsel %vm201, %v193, 0
        %v212 = vsel %vm201, %v194, 0
        %v215 = vsel %vm201, %v195, 0
        %v218 = vsel %vm201, %v196, 0
        %v221 = vsel %vm201, %v197, 0
        %v224 = vsel %vm201, %v198, 0
        %226 = vmatprep.subr.mxu0 0.0
        %227 = vmatpush1.msra.mxu0 0.0
        %228 = vmatprep.subr.mxu0 0.0
        %229 = vmatpush1.msra.mxu0 0.0
        %230 = vmatprep.subr.mxu0 0.0
        %231 = vmatpush1.msra.mxu0 0.0
        %232 = vmatprep.subr.mxu0 0.0
        %233 = vmatpush1.msra.mxu0 0.0
        %234 = vmatprep.subr.mxu0 0.0
        %235 = vmatpush1.msra.mxu0 0.0
        %236 = vmatprep.subr.mxu0 0.0
        %237 = vmatpush1.msra.mxu0 0.0
        %238 = vmatprep.subr.mxu0 0.0
        %239 = vmatpush1.msra.mxu0 0.0
        %240 = vmatprep.subr.mxu0 0.0
        %241 = vmatpush1.msra.mxu0 0.0
        %242 = vmatprep.subr.mxu0 0.0
        %243 = vmatpush1.msra.mxu0 0.0
        %244 = vmatprep.subr.mxu0 0.0
        %245 = vmatpush1.msra.mxu0 0.0
        %246 = vmatprep.subr.mxu0 0.0
        %247 = vmatpush1.msra.mxu0 0.0
        %248 = vmatprep.subr.mxu0 0.0
        %249 = vmatpush1.msra.mxu0 0.0
        %250 = vmatprep.subr.mxu0 0.0
        %251 = vmatpush1.msra.mxu0 0.0
        %252 = vmatprep.subr.mxu0 0.0
        %253 = vmatpush1.msra.mxu0 0.0
        %254 = vmatprep.subr.mxu0 0.0
        %255 = vmatpush1.msra.mxu0 %v200
        %256 = vmatprep.subr.mxu0 0.0
        %257 = vmatpush1.msra.mxu0 %v199
        %258 = vmatprep.subr.mxu0 0.0
        %259 = vmatpush2.msra.mxu0 0.0
        %260 = vmatprep.subr.mxu0 0.0
        %261 = vmatpush2.msra.mxu0 0.0
        %262 = vmatprep.subr.mxu0 0.0
        %263 = vmatpush2.msra.mxu0 0.0
        %264 = vmatprep.subr.mxu0 0.0
        %265 = vmatpush2.msra.mxu0 0.0
        %266 = vmatprep.subr.mxu0 0.0
        %267 = vmatpush2.msra.mxu0 0.0
        %268 = vmatprep.subr.mxu0 0.0
        %269 = vmatpush2.msra.mxu0 0.0
        %270 = vmatprep.subr.mxu0 0.0
        %271 = vmatpush2.msra.mxu0 0.0
        %272 = vmatprep.subr.mxu0 0.0
        %273 = vmatpush2.msra.mxu0 0.0
        %274 = vmatprep.subr.mxu0 0.0
        %275 = vmatpush2.msra.mxu0 0.0
        %276 = vmatprep.subr.mxu0 0.0
        %277 = vmatpush2.msra.mxu0 0.0
        %278 = vmatprep.subr.mxu0 0.0
        %279 = vmatpush2.msra.mxu0 0.0
        %280 = vmatprep.subr.mxu0 0.0
        %281 = vmatpush2.msra.mxu0 0.0
        %282 = vmatprep.subr.mxu0 0.0
        %283 = vmatpush2.msra.mxu0 0.0
        %284 = vmatprep.subr.mxu0 0.0
        %285 = vmatpush2.msra.mxu0 0.0
        %286 = vmatprep.subr.mxu0 0.0
        %287 = vmatpush2.msra.mxu0 0.0
        %288 = vmatprep.subr.mxu0 0.0
        %289 = vmatpush2.msra.mxu0 0.0
        %290 = vmatprep.mubr.f32.mxu0 0.0
        %291 = vmatmul.mubr.f32.gmra.mxu0 %v203
        %v292 = vpop.f32.mrf.mxu0
        %v293 = vadd.f32 0.0, %v292
        %v294 = vpop.f32.mrf.mxu0
        %295 = vmatprep.mubr.f32.mxu0 0.0
        %296 = vmatmul.mubr.f32.gmra.mxu0 %v206
        %v297 = vpop.f32.mrf.mxu0
        %v298 = vadd.f32 0.0, %v297
        %v299 = vpop.f32.mrf.mxu0
        %300 = vmatprep.mubr.f32.mxu0 0.0
        %301 = vmatmul.mubr.f32.gmra.mxu0 %v209
        %v302 = vpop.f32.mrf.mxu0
        %v303 = vadd.f32 0.0, %v302
        %v304 = vpop.f32.mrf.mxu0
        %305 = vmatprep.mubr.f32.mxu0 0.0
        %306 = vmatmul.mubr.f32.gmra.mxu0 %v212
        %v307 = vpop.f32.mrf.mxu0
        %v308 = vadd.f32 0.0, %v307
        %v309 = vpop.f32.mrf.mxu0
        %310 = vmatprep.mubr.f32.mxu0 0.0
        %311 = vmatmul.mubr.f32.gmra.mxu0 %v215
        %v312 = vpop.f32.mrf.mxu0
        %v313 = vadd.f32 0.0, %v312
        %v314 = vpop.f32.mrf.mxu0
        %315 = vmatprep.mubr.f32.mxu0 0.0
        %316 = vmatmul.mubr.f32.gmra.mxu0 %v218
        %v317 = vpop.f32.mrf.mxu0
        %v318 = vadd.f32 0.0, %v317
        %v319 = vpop.f32.mrf.mxu0
        %320 = vmatprep.mubr.f32.mxu0 0.0
        %321 = vmatmul.mubr.f32.gmra.mxu0 %v221
        %v322 = vpop.f32.mrf.mxu0
        %v323 = vadd.f32 0.0, %v322
        %v324 = vpop.f32.mrf.mxu0
        %325 = vmatprep.mubr.f32.mxu0 0.0
        %326 = vmatmul.mubr.f32.gmra.mxu0 %v224
        %v327 = vpop.f32.mrf.mxu0
        %v328 = vadd.f32 0.0, %v327
        %v329 = vpop.f32.mrf.mxu0
        %330 = vdwg.mxu0
        %v331 = vld [vmem:[%s1] sm:$0xff]
        %v333 = vsel %vm201, %v331, 0
        %335 = vmatprep.subr.mxu0 0.0
        %336 = vmatpush1.msra.mxu0 0.0
        %337 = vmatprep.subr.mxu0 0.0
        %338 = vmatpush1.msra.mxu0 0.0
        %339 = vmatprep.subr.mxu0 0.0
        %340 = vmatpush1.msra.mxu0 0.0
        %341 = vmatprep.subr.mxu0 0.0
        %342 = vmatpush1.msra.mxu0 0.0
        %343 = vmatprep.subr.mxu0 0.0
        %344 = vmatpush1.msra.mxu0 0.0
        %345 = vmatprep.subr.mxu0 0.0
        %346 = vmatpush1.msra.mxu0 0.0
        %347 = vmatprep.subr.mxu0 0.0
        %348 = vmatpush1.msra.mxu0 0.0
        %349 = vmatprep.subr.mxu0 0.0
        %350 = vmatpush1.msra.mxu0 0.0
        %351 = vmatprep.subr.mxu0 0.0
        %352 = vmatpush1.msra.mxu0 0.0
        %353 = vmatprep.subr.mxu0 0.0
        %354 = vmatpush1.msra.mxu0 0.0
        %355 = vmatprep.subr.mxu0 0.0
        %356 = vmatpush1.msra.mxu0 0.0
        %357 = vmatprep.subr.mxu0 0.0
        %358 = vmatpush1.msra.mxu0 0.0
        %359 = vmatprep.subr.mxu0 0.0
        %360 = vmatpush1.msra.mxu0 0.0
        %361 = vmatprep.subr.mxu0 0.0
        %362 = vmatpush1.msra.mxu0 0.0
        %363 = vmatprep.subr.mxu0 0.0
        %364 = vmatpush1.msra.mxu0 %v298
        %365 = vmatprep.subr.mxu0 0.0
        %366 = vmatpush1.msra.mxu0 %v293
        %367 = vmatprep.subr.mxu0 0.0
        %368 = vmatpush2.msra.mxu0 0.0
        %369 = vmatprep.subr.mxu0 0.0
        %370 = vmatpush2.msra.mxu0 0.0
        %371 = vmatprep.subr.mxu0 0.0
        %372 = vmatpush2.msra.mxu0 0.0
        %373 = vmatprep.subr.mxu0 0.0
        %374 = vmatpush2.msra.mxu0 0.0
        %375 = vmatprep.subr.mxu0 0.0
        %376 = vmatpush2.msra.mxu0 0.0
        %377 = vmatprep.subr.mxu0 0.0
        %378 = vmatpush2.msra.mxu0 0.0
        %379 = vmatprep.subr.mxu0 0.0
        %380 = vmatpush2.msra.mxu0 0.0
        %381 = vmatprep.subr.mxu0 0.0
        %382 = vmatpush2.msra.mxu0 0.0
        %383 = vmatprep.subr.mxu0 0.0
        %384 = vmatpush2.msra.mxu0 0.0
        %385 = vmatprep.subr.mxu0 0.0
        %386 = vmatpush2.msra.mxu0 0.0
        %387 = vmatprep.subr.mxu0 0.0
        %388 = vmatpush2.msra.mxu0 0.0
        %389 = vmatprep.subr.mxu0 0.0
        %390 = vmatpush2.msra.mxu0 0.0
        %391 = vmatprep.subr.mxu0 0.0
        %392 = vmatpush2.msra.mxu0 0.0
        %393 = vmatprep.subr.mxu0 0.0
        %394 = vmatpush2.msra.mxu0 0.0
        %395 = vmatprep.subr.mxu0 0.0
        %396 = vmatpush2.msra.mxu0 0.0
        %397 = vmatprep.subr.mxu0 0.0
        %398 = vmatpush2.msra.mxu0 0.0
        %399 = vmatprep.mubr.f32.mxu0 0.0
        %400 = vmatmul.mubr.f32.gmra.mxu0 %v333
        %v401 = vpop.f32.mrf.mxu0
        %v402 = vadd.f32 0.0, %v401
        %v403 = vpop.f32.mrf.mxu0
        %404 = vdwg.mxu0
        %405 = vmatprep.subr.mxu0 0.0
        %406 = vmatpush1.msra.mxu0 0.0
        %407 = vmatprep.subr.mxu0 0.0
        %408 = vmatpush1.msra.mxu0 0.0
        %409 = vmatprep.subr.mxu0 0.0
        %410 = vmatpush1.msra.mxu0 0.0
        %411 = vmatprep.subr.mxu0 0.0
        %412 = vmatpush1.msra.mxu0 0.0
        %413 = vmatprep.subr.mxu0 0.0
        %414 = vmatpush1.msra.mxu0 0.0
        %415 = vmatprep.subr.mxu0 0.0
        %416 = vmatpush1.msra.mxu0 0.0
        %417 = vmatprep.subr.mxu0 0.0
        %418 = vmatpush1.msra.mxu0 0.0
        %419 = vmatprep.subr.mxu0 0.0
        %420 = vmatpush1.msra.mxu0 0.0
        %421 = vmatprep.subr.mxu0 0.0
        %422 = vmatpush1.msra.mxu0 0.0
        %423 = vmatprep.subr.mxu0 0.0
        %424 = vmatpush1.msra.mxu0 0.0
        %425 = vmatprep.subr.mxu0 0.0
        %426 = vmatpush1.msra.mxu0 0.0
        %427 = vmatprep.subr.mxu0 0.0
        %428 = vmatpush1.msra.mxu0 0.0
        %429 = vmatprep.subr.mxu0 0.0
        %430 = vmatpush1.msra.mxu0 0.0
        %431 = vmatprep.subr.mxu0 0.0
        %432 = vmatpush1.msra.mxu0 0.0
        %433 = vmatprep.subr.mxu0 0.0
        %434 = vmatpush1.msra.mxu0 %v308
        %435 = vmatprep.subr.mxu0 0.0
        %436 = vmatpush1.msra.mxu0 %v303
        %437 = vmatprep.subr.mxu0 0.0
        %438 = vmatpush2.msra.mxu0 0.0
        %439 = vmatprep.subr.mxu0 0.0
        %440 = vmatpush2.msra.mxu0 0.0
        %441 = vmatprep.subr.mxu0 0.0
        %442 = vmatpush2.msra.mxu0 0.0
        %443 = vmatprep.subr.mxu0 0.0
        %444 = vmatpush2.msra.mxu0 0.0
        %445 = vmatprep.subr.mxu0 0.0
        %446 = vmatpush2.msra.mxu0 0.0
        %447 = vmatprep.subr.mxu0 0.0
        %448 = vmatpush2.msra.mxu0 0.0
        %449 = vmatprep.subr.mxu0 0.0
        %450 = vmatpush2.msra.mxu0 0.0
        %451 = vmatprep.subr.mxu0 0.0
        %452 = vmatpush2.msra.mxu0 0.0
        %453 = vmatprep.subr.mxu0 0.0
        %454 = vmatpush2.msra.mxu0 0.0
        %455 = vmatprep.subr.mxu0 0.0
        %456 = vmatpush2.msra.mxu0 0.0
        %457 = vmatprep.subr.mxu0 0.0
        %458 = vmatpush2.msra.mxu0 0.0
        %459 = vmatprep.subr.mxu0 0.0
        %460 = vmatpush2.msra.mxu0 0.0
        %461 = vmatprep.subr.mxu0 0.0
        %462 = vmatpush2.msra.mxu0 0.0
        %463 = vmatprep.subr.mxu0 0.0
        %464 = vmatpush2.msra.mxu0 0.0
        %465 = vmatprep.subr.mxu0 0.0
        %466 = vmatpush2.msra.mxu0 0.0
        %467 = vmatprep.subr.mxu0 0.0
        %468 = vmatpush2.msra.mxu0 0.0
        %469 = vmatprep.mubr.f32.mxu0 0.0
        %470 = vmatmul.mubr.f32.gmra.mxu0 %v333
        %v471 = vpop.f32.mrf.mxu0
        %v472 = vadd.f32 0.0, %v471
        %v473 = vpop.f32.mrf.mxu0
        %474 = vdwg.mxu0
        %475 = vmatprep.subr.mxu0 0.0
        %476 = vmatpush1.msra.mxu0 0.0
        %477 = vmatprep.subr.mxu0 0.0
        %478 = vmatpush1.msra.mxu0 0.0
        %479 = vmatprep.subr.mxu0 0.0
        %480 = vmatpush1.msra.mxu0 0.0
        %481 = vmatprep.subr.mxu0 0.0
        %482 = vmatpush1.msra.mxu0 0.0
        %483 = vmatprep.subr.mxu0 0.0
        %484 = vmatpush1.msra.mxu0 0.0
        %485 = vmatprep.subr.mxu0 0.0
        %486 = vmatpush1.msra.mxu0 0.0
        %487 = vmatprep.subr.mxu0 0.0
        %488 = vmatpush1.msra.mxu0 0.0
        %489 = vmatprep.subr.mxu0 0.0
        %490 = vmatpush1.msra.mxu0 0.0
        %491 = vmatprep.subr.mxu0 0.0
        %492 = vmatpush1.msra.mxu0 0.0
        %493 = vmatprep.subr.mxu0 0.0
        %494 = vmatpush1.msra.mxu0 0.0
        %495 = vmatprep.subr.mxu0 0.0
        %496 = vmatpush1.msra.mxu0 0.0
        %497 = vmatprep.subr.mxu0 0.0
        %498 = vmatpush1.msra.mxu0 0.0
        %499 = vmatprep.subr.mxu0 0.0
        %500 = vmatpush1.msra.mxu0 0.0
        %501 = vmatprep.subr.mxu0 0.0
        %502 = vmatpush1.msra.mxu0 0.0
        %503 = vmatprep.subr.mxu0 0.0
        %504 = vmatpush1.msra.mxu0 %v318
        %505 = vmatprep.subr.mxu0 0.0
        %506 = vmatpush1.msra.mxu0 %v313
        %507 = vmatprep.subr.mxu0 0.0
        %508 = vmatpush2.msra.mxu0 0.0
        %509 = vmatprep.subr.mxu0 0.0
        %510 = vmatpush2.msra.mxu0 0.0
        %511 = vmatprep.subr.mxu0 0.0
        %512 = vmatpush2.msra.mxu0 0.0
        %513 = vmatprep.subr.mxu0 0.0
        %514 = vmatpush2.msra.mxu0 0.0
        %515 = vmatprep.subr.mxu0 0.0
        %516 = vmatpush2.msra.mxu0 0.0
        %517 = vmatprep.subr.mxu0 0.0
        %518 = vmatpush2.msra.mxu0 0.0
        %519 = vmatprep.subr.mxu0 0.0
        %520 = vmatpush2.msra.mxu0 0.0
        %521 = vmatprep.subr.mxu0 0.0
        %522 = vmatpush2.msra.mxu0 0.0
        %523 = vmatprep.subr.mxu0 0.0
        %524 = vmatpush2.msra.mxu0 0.0
        %525 = vmatprep.subr.mxu0 0.0
        %526 = vmatpush2.msra.mxu0 0.0
        %527 = vmatprep.subr.mxu0 0.0
        %528 = vmatpush2.msra.mxu0 0.0
        %529 = vmatprep.subr.mxu0 0.0
        %530 = vmatpush2.msra.mxu0 0.0
        %531 = vmatprep.subr.mxu0 0.0
        %532 = vmatpush2.msra.mxu0 0.0
        %533 = vmatprep.subr.mxu0 0.0
        %534 = vmatpush2.msra.mxu0 0.0
        %535 = vmatprep.subr.mxu0 0.0
        %536 = vmatpush2.msra.mxu0 0.0
        %537 = vmatprep.subr.mxu0 0.0
        %538 = vmatpush2.msra.mxu0 0.0
        %539 = vmatprep.mubr.f32.mxu0 0.0
        %540 = vmatmul.mubr.f32.gmra.mxu0 %v333
        %v541 = vpop.f32.mrf.mxu0
        %v542 = vadd.f32 0.0, %v541
        %v543 = vpop.f32.mrf.mxu0
        %544 = vdwg.mxu0
        %545 = vmatprep.subr.mxu0 0.0
        %546 = vmatpush1.msra.mxu0 0.0
        %547 = vmatprep.subr.mxu0 0.0
        %548 = vmatpush1.msra.mxu0 0.0
        %549 = vmatprep.subr.mxu0 0.0
        %550 = vmatpush1.msra.mxu0 0.0
        %551 = vmatprep.subr.mxu0 0.0
        %552 = vmatpush1.msra.mxu0 0.0
        %553 = vmatprep.subr.mxu0 0.0
        %554 = vmatpush1.msra.mxu0 0.0
        %555 = vmatprep.subr.mxu0 0.0
        %556 = vmatpush1.msra.mxu0 0.0
        %557 = vmatprep.subr.mxu0 0.0
        %558 = vmatpush1.msra.mxu0 0.0
        %559 = vmatprep.subr.mxu0 0.0
        %560 = vmatpush1.msra.mxu0 0.0
        %561 = vmatprep.subr.mxu0 0.0
        %562 = vmatpush1.msra.mxu0 0.0
        %563 = vmatprep.subr.mxu0 0.0
        %564 = vmatpush1.msra.mxu0 0.0
        %565 = vmatprep.subr.mxu0 0.0
        %566 = vmatpush1.msra.mxu0 0.0
        %567 = vmatprep.subr.mxu0 0.0
        %568 = vmatpush1.msra.mxu0 0.0
        %569 = vmatprep.subr.mxu0 0.0
        %570 = vmatpush1.msra.mxu0 0.0
        %571 = vmatprep.subr.mxu0 0.0
        %572 = vmatpush1.msra.mxu0 0.0
        %573 = vmatprep.subr.mxu0 0.0
        %574 = vmatpush1.msra.mxu0 %v328
        %575 = vmatprep.subr.mxu0 0.0
        %576 = vmatpush1.msra.mxu0 %v323
        %577 = vmatprep.subr.mxu0 0.0
        %578 = vmatpush2.msra.mxu0 0.0
        %579 = vmatprep.subr.mxu0 0.0
        %580 = vmatpush2.msra.mxu0 0.0
        %581 = vmatprep.subr.mxu0 0.0
        %582 = vmatpush2.msra.mxu0 0.0
        %583 = vmatprep.subr.mxu0 0.0
        %584 = vmatpush2.msra.mxu0 0.0
        %585 = vmatprep.subr.mxu0 0.0
        %586 = vmatpush2.msra.mxu0 0.0
        %587 = vmatprep.subr.mxu0 0.0
        %588 = vmatpush2.msra.mxu0 0.0
        %589 = vmatprep.subr.mxu0 0.0
        %590 = vmatpush2.msra.mxu0 0.0
        %591 = vmatprep.subr.mxu0 0.0
        %592 = vmatpush2.msra.mxu0 0.0
        %593 = vmatprep.subr.mxu0 0.0
        %594 = vmatpush2.msra.mxu0 0.0
        %595 = vmatprep.subr.mxu0 0.0
        %596 = vmatpush2.msra.mxu0 0.0
        %597 = vmatprep.subr.mxu0 0.0
        %598 = vmatpush2.msra.mxu0 0.0
        %599 = vmatprep.subr.mxu0 0.0
        %600 = vmatpush2.msra.mxu0 0.0
        %601 = vmatprep.subr.mxu0 0.0
        %602 = vmatpush2.msra.mxu0 0.0
        %603 = vmatprep.subr.mxu0 0.0
        %604 = vmatpush2.msra.mxu0 0.0
        %605 = vmatprep.subr.mxu0 0.0
        %606 = vmatpush2.msra.mxu0 0.0
        %607 = vmatprep.subr.mxu0 0.0
        %608 = vmatpush2.msra.mxu0 0.0
        %609 = vmatprep.mubr.f32.mxu0 0.0
        %610 = vmatmul.mubr.f32.gmra.mxu0 %v333
        %v611 = vpop.f32.mrf.mxu0
        %v612 = vadd.f32 0.0, %v611
        %v613 = vpop.f32.mrf.mxu0
        %614 = vdwg.mxu0
        %v615 = vcombine.low %v402, %v542
        %v616 = vcombine.high %v402, %v542
        %v618 = vunpack.c.l.s4 1983009808
        %v619 = vunpack.c.0.s8 %v618
        %v620 = vlaneseq
        %v621 = vshrl.u32 %v620, 7
        %v622 = vsub.s32 %v619, %v621
        %v623 = vrot.slane %v615, %v622
        %v625 = vunpack.c.l.s4 1983009808
        %v626 = vunpack.c.0.s8 %v625
        %v627 = vlaneseq
        %v628 = vshrl.u32 %v627, 7
        %v629 = vsub.s32 %v626, %v628
        %v630 = vrot.slane %v616, %v629
        %v631 = vcombine.low %v472, %v612
        %v632 = vcombine.high %v472, %v612
        %v634 = vunpack.c.l.s4 1983009808
        %v635 = vunpack.c.0.s8 %v634
        %v636 = vlaneseq
        %v637 = vshrl.u32 %v636, 7
        %v638 = vsub.s32 %v635, %v637
        %v639 = vrot.slane %v631, %v638
        %v641 = vunpack.c.l.s4 1983009808
        %v642 = vunpack.c.0.s8 %v641
        %v643 = vlaneseq
        %v644 = vshrl.u32 %v643, 7
        %v645 = vsub.s32 %v642, %v644
        %v646 = vrot.slane %v632, %v645
        %v647 = vcombine.low %v623, %v639
        %v648 = vcombine.high %v623, %v639
        %v650 = vunpack.c.l.s4 1934713408
        %v651 = vunpack.c.0.s8 %v650
        %v652 = vlaneseq
        %v653 = vshrl.u32 %v652, 7
        %v654 = vsub.s32 %v651, %v653
        %v655 = vrot.slane %v647, %v654
        %v657 = vunpack.c.l.s4 1934713408
        %v658 = vunpack.c.0.s8 %v657
        %v659 = vlaneseq
        %v660 = vshrl.u32 %v659, 7
        %v661 = vsub.s32 %v658, %v660
        %v662 = vrot.slane %v648, %v661
        %v663 = vcombine.low %v630, %v646
        %v664 = vcombine.high %v630, %v646
        %v666 = vunpack.c.l.s4 1934713408
        %v667 = vunpack.c.0.s8 %v666
        %v668 = vlaneseq
        %v669 = vshrl.u32 %v668, 7
        %v670 = vsub.s32 %v667, %v669
        %v671 = vrot.slane %v663, %v670
        %v673 = vunpack.c.l.s4 1934713408
        %v674 = vunpack.c.0.s8 %v673
        %v675 = vlaneseq
        %v676 = vshrl.u32 %v675, 7
        %v677 = vsub.s32 %v674, %v676
        %v678 = vrot.slane %v664, %v677
        %v679 = vcombine.high %v655, 0.0
        %v680 = vcombine.high %v662, 0.0
        %v681 = vcombine.high %v671, 0.0
        %v682 = vcombine.high %v678, 0.0
        %684 = vrot.lane.b32.xlu0 %v679, 8
        %v685 = vpop.permute.xlu0 %684
        %688 = vrot.lane.b32.xlu0 %v662, 16
        %v689 = vpop.permute.xlu0 %688
        %692 = vrot.lane.b32.xlu0 %v680, 24
        %v693 = vpop.permute.xlu0 %692
        %696 = vrot.lane.b32.xlu0 %v671, 32
        %v697 = vpop.permute.xlu0 %696
        %700 = vrot.lane.b32.xlu0 %v681, 40
        %v701 = vpop.permute.xlu0 %700
        %704 = vrot.lane.b32.xlu0 %v678, 48
        %v705 = vpop.permute.xlu0 %704
        %708 = vrot.lane.b32.xlu0 %v682, 56
        %v709 = vpop.permute.xlu0 %708
        %vm711 = vcmask 64512
        %v712 = vsel %vm711, %v655, %v685
        %v713 = vsel %vm201, %v712, %v689
        %vm714 = vcmask 195584
        %v715 = vsel %vm714, %v713, %v693
        %vm716 = vcmask 261120
        %v717 = vsel %vm716, %v715, %v697
        %vm718 = vcmask 326656
        %v719 = vsel %vm718, %v717, %v701
        %vm720 = vcmask 392192
        %v721 = vsel %vm720, %v719, %v705
        %vm722 = vcmask 457728
        %v723 = vsel %vm722, %v721, %v709
        %vm724 = vcmask 519168
        %725 = vst.msk [vmem:[%s189] sm:$0xf] %vm724, %v723
        %s726 = sand.u32 %s96, 1
        %s727 = scalar_lea.sflag [#allocation4], %s726
        %s728 = sand.u32 %s96, 1
        %s729 = smul.addr %s728, 4
        %s730 = scalar_lea.vmem [#allocation5], %s729
        // Predicated region
        $region37: #{tpu_custom_call.1} parent=31 // pred_check
          %p731 = pneg %p106
        $region38: #{tpu_custom_call.1} parent=31 // pred_check_branch
          %733 = sbr.rel (%p731) target = $region40
        $region39: #{tpu_custom_call.1} parent=31 // pred_region
          %s735 = ssub.s32 64, 64
          %736 = vsyncadd %s727, %s735
          %s737 = smul.addr %s20, 64
          %s738 = scalar_lea.hbm %s3, %s737
          %s740 = sshll.u32 %s730, 4
          %s741 = int_to_ptr.vmem [resolvable:$true] %s740
          %743 = dma.vmem_to_hbm [thread:$0]  %s741, 64, %s738, %s727
        $region40: #{tpu_custom_call.1} parent=31 // pred_fallthru
          _
      $region32: #{tpu_custom_call.1} parent=5 // pred_fallthru
        _
      %p744 = scmp.le.s32.totalorder 2, %s15
      // Predicated region
      $region41: #{tpu_custom_call.1} parent=5 // pred_check
        %p745 = pneg %p744
      $region42: #{tpu_custom_call.1} parent=5 // pred_check_branch
        %747 = sbr.rel (%p745) target = $region44
      $region43: #{tpu_custom_call.1} parent=5 // pred_region
        %s748 = ssub.s32 %s15, 2
        // Predicated region
        $region45: #{tpu_custom_call.1} parent=43 // pred_check
          %p749 = pneg %p112
        $region46: #{tpu_custom_call.1} parent=43 // pred_check_branch
          %751 = sbr.rel (%p749) target = $region48
        $region47: #{tpu_custom_call.1} parent=43 // pred_region
          %s752 = sand.u32 %s97, 1
          %s753 = scalar_lea.sflag [#allocation4], %s752
          %s754 = sand.u32 %s97, 1
          %s755 = smul.addr %s754, 4
          %s756 = scalar_lea.vmem [#allocation5], %s755
          %757 = dma.done %s753, 64
        $region48: #{tpu_custom_call.1} parent=43 // pred_fallthru
          _
      $region44: #{tpu_custom_call.1} parent=5 // pred_fallthru
        _
    $region6: #{tpu_custom_call.1} parent=1 // loop_footer
      %s19 = sadd.s32 1, %s15
    $region7: #{tpu_custom_call.1} parent=1 // loop_footer_branch
      %14 = sbr.rel target = $region3
    $region8: #{tpu_custom_call.1} parent=1 // loop_exit
      _
    %758 = vsyncpa [#allocation3], 1
    %s759 = scalar_lea.sflag [#allocation3], 1
    %760 = vsyncpa %s759, 1
    %761 = vsyncpa [#allocation4], 1
    %s762 = scalar_lea.sflag [#allocation4], 1
    %763 = vsyncpa %s762, 1

</llo_original>
